<compile_context>
chip_gen: v7x
topology: tpu7x:2x2x1
jax: 0.10.0
libtpu: 0.0.40
codegen_flags: <defaults>
</compile_context>

<pallas_src>
import functools

import jax
import jax.numpy as jnp
from jax import lax
from jax.experimental import pallas as pl
from jax.experimental.pallas import tpu as pltpu


def _hubert_pooler_kernel(h_ref, w_ref, b_ref, o_ref, acc_ref, *,
                          seq_len, seq_tile, needs_mask):
    # h_ref: (tb, ts, H_in)  w_ref: (H_in, H_out)  b_ref: (1, H_out)
    # o_ref: (tb, H_out)     acc_ref: (tb, H_in) f32 scratch
    s = pl.program_id(1)

    @pl.when(s == 0)
    def _():
        acc_ref[...] = jnp.zeros_like(acc_ref)

    h = h_ref[...]  # streamed in its native dtype (no full f32 upcast copy)
    if needs_mask:
        # Last seq block may extend past the true sequence length: mask it out.
        pos = s * seq_tile + lax.broadcasted_iota(jnp.int32, (1, seq_tile, 1), 1)
        h = jnp.where(pos < seq_len, h, jnp.zeros((), h.dtype))

    # Partial sum over this sequence chunk, accumulated in f32.
    acc_ref[...] += jnp.sum(h, axis=1, dtype=jnp.float32)

    @pl.when(s == pl.num_programs(1) - 1)
    def _():
        # clamp(seq_len, 1e-9) folded into a compile-time constant multiply.
        inv_len = jnp.float32(1.0 / max(float(seq_len), 1e-9))
        pooled = (acc_ref[...] * inv_len).astype(w_ref.dtype)   # (tb, H_in)
        y = jnp.dot(pooled, w_ref[...], preferred_element_type=jnp.float32)
        y = y + b_ref[...].astype(jnp.float32)                  # broadcast (1, H_out)
        o_ref[...] = jnp.tanh(y).astype(o_ref.dtype)


def _choose_seq_tile(b_tile, seq_len, h_in, itemsize,
                     budget_bytes=8 * 1024 * 1024):
    """Biggest seq tile whose single buffer stays under `budget_bytes`."""
    if seq_len <= 8:
        return seq_len
    ts = budget_bytes // max(1, b_tile * h_in * itemsize)
    ts = max(8, min(int(ts), seq_len))
    ts -= ts % 8                      # sublane alignment for the (ts, H_in) tile
    return seq_len if ts >= seq_len else ts


def hubert_pooler(hidden_states, attention_mask, weight, bias, *, seq_tile=None):
    """hidden_states: [B, S, H_in], weight: [H_out, H_in] (torch layout), bias: [H_out]."""
    del attention_mask  # reference forward overwrites it with ones -> plain mean
    B, S, H_in = hidden_states.shape
    H_out = weight.shape[0]
    itemsize = jnp.dtype(hidden_states.dtype).itemsize

    # Batch tile: whole batch when small, otherwise a multiple of 8 so the
    # (tb, H_out) output block satisfies the (8,128) tiling rule.
    tb = 8 if (B >= 16 and B % 8 == 0) else B
    if seq_tile is None:
        seq_tile = _choose_seq_tile(tb, S, H_in, itemsize)
    ts = min(int(seq_tile), S)
    if ts < S:
        ts = max(8, ts - ts % 8)

    num_b = B // tb
    num_s = pl.cdiv(S, ts)
    needs_mask = (S % ts) != 0

    w_t = weight.T                     # (H_in, H_out): plain MXU matmul layout
    b2d = bias.reshape(1, H_out)       # keep 2D for TPU layout

    kernel = functools.partial(
        _hubert_pooler_kernel, seq_len=S, seq_tile=ts, needs_mask=needs_mask)

    w_bytes = w_t.size * jnp.dtype(w_t.dtype).itemsize
    b_bytes = b2d.size * jnp.dtype(b2d.dtype).itemsize
    cost = pl.CostEstimate(
        flops=2 * B * H_in * H_out + B * S * H_in,
        transcendentals=B * H_out,
        bytes_accessed=B * S * H_in * itemsize + w_bytes + b_bytes
                       + B * H_out * itemsize,
    )

    # VMEM budget: double-buffered activation tile + weight/bias/output buffers
    # + f32 accumulator scratch, with 2x headroom; clamped for v7x's 64 MiB VMEM.
    vmem_needed = (2 * tb * ts * H_in * itemsize
                   + 2 * w_bytes + 2 * b_bytes
                   + 2 * tb * H_out * itemsize
                   + tb * H_in * 4)
    vmem_limit = int(min(max(2 * vmem_needed, 32 * 1024 * 1024),
                         56 * 1024 * 1024))

    return pl.pallas_call(
        kernel,
        out_shape=jax.ShapeDtypeStruct((B, H_out), hidden_states.dtype),
        grid_spec=pltpu.PrefetchScalarGridSpec(
            num_scalar_prefetch=0,
            grid=(num_b, num_s),
            in_specs=[
                pl.BlockSpec((tb, ts, H_in), lambda b, s: (b, s, 0)),
                pl.BlockSpec((H_in, H_out), lambda b, s: (0, 0)),
                pl.BlockSpec((1, H_out), lambda b, s: (0, 0)),
            ],
            out_specs=pl.BlockSpec((tb, H_out), lambda b, s: (b, 0)),
            scratch_shapes=[pltpu.VMEM((tb, H_in), jnp.float32)],
        ),
        compiler_params=pltpu.CompilerParams(
            dimension_semantics=("parallel", "arbitrary"),
            vmem_limit_bytes=vmem_limit,
        ),
        cost_estimate=cost,
    )(hidden_states, w_t, b2d)


def _reference(hidden_states, weight, bias):
    S = hidden_states.shape[1]
    pooled = jnp.sum(hidden_states.astype(jnp.float32), axis=1) / max(float(S), 1e-9)
    return jnp.tanh(pooled @ weight.T.astype(jnp.float32) + bias.astype(jnp.float32))


if __name__ == "__main__":
    B, S = 2, 8
    H_IN, H_OUT = 32, 32

    key = jax.random.PRNGKey(0)
    k_h, k_w, k_b, k_h2 = jax.random.split(key, 4)

    hidden_states = jax.random.normal(k_h, (B, S, H_IN), dtype=jnp.float32)
    attention_mask = jnp.ones((B, S), dtype=jnp.float32)  # unused per module semantics

    # Deterministic parameter init (shapes from nn.Linear(H_IN, H_OUT)).
    weight = jax.random.normal(k_w, (H_OUT, H_IN), dtype=jnp.float32) * 0.02
    bias = jax.random.normal(k_b, (H_OUT,), dtype=jnp.float32) * 0.02

    # Test 1: single-block path.
    out = hubert_pooler(hidden_states, attention_mask, weight, bias)
    out = jax.block_until_ready(out)
    ref = _reference(hidden_states, weight, bias)
    assert out.shape == (B, H_OUT)
    assert jnp.allclose(out, ref, atol=1e-5, rtol=1e-5), "mismatch vs reference (S=8)"

    # Test 2: multi-step sequence grid + tail masking (S not a multiple of the tile).
    S2 = 12
    hidden_states2 = jax.random.normal(k_h2, (B, S2, H_IN), dtype=jnp.float32)
    attention_mask2 = jnp.ones((B, S2), dtype=jnp.float32)
    out2 = hubert_pooler(hidden_states2, attention_mask2, weight, bias, seq_tile=8)
    out2 = jax.block_until_ready(out2)
    ref2 = _reference(hidden_states2, weight, bias)
    assert out2.shape == (B, H_OUT)
    assert jnp.allclose(out2, ref2, atol=1e-5, rtol=1e-5), "mismatch vs reference (S=12)"

    print("KERNEL_OK")
</pallas_src>

<mosaic_0001>
module attributes {stable_mosaic.version = 11 : i64} {
  func.func @_hubert_pooler_kernel(%arg0: i32, %arg1: i32, %arg2: memref<2x8x32xf32, #tpu.memory_space<vmem>>, %arg3: memref<32x32xf32, #tpu.memory_space<vmem>>, %arg4: memref<1x32xf32, #tpu.memory_space<vmem>>, %arg5: memref<2x32xf32, #tpu.memory_space<vmem>>, %arg6: memref<2x32xf32, #tpu.memory_space<vmem>>) attributes {dimension_semantics = [#tpu.dimension_semantics<parallel>, #tpu.dimension_semantics<arbitrary>], iteration_bounds = array<i64: 1, 1>, scalar_prefetch = 0 : i64, scratch_operands = 1 : i64, tpu.core_type = #tpu.core_type<tc>, window_params = [{transform_indices = @transform_0, window_bounds = array<i64: 2, 8, 32>}, {pipeline_mode = #tpu.pipeline_mode<synchronous>, transform_indices = @transform_1, window_bounds = array<i64: 32, 32>}, {pipeline_mode = #tpu.pipeline_mode<synchronous>, transform_indices = @transform_2, window_bounds = array<i64: 1, 32>}, {transform_indices = @transform_3, window_bounds = array<i64: 2, 32>}]} {
    %c0_i32 = arith.constant 0 : i32
    %0 = arith.cmpi eq, %arg1, %c0_i32 : i32
    %1 = arith.extui %0 : i1 to i32
    %c0_i32_0 = arith.constant 0 : i32
    %2 = arith.cmpi ne, %1, %c0_i32_0 : i32
    scf.if %2 {
      %cst_9 = arith.constant 0.000000e+00 : f32
      %11 = vector.broadcast %cst_9 : f32 to vector<2x32xf32>
      %c0_10 = arith.constant 0 : index
      %c0_11 = arith.constant 0 : index
      %12 = vector.load %arg6[%c0_10, %c0_11] : memref<2x32xf32, #tpu.memory_space<vmem>>, vector<2x32xf32>
      tpu.vector_store %arg6[%c0_10, %c0_11], %11 {strides = array<i32>} : memref<2x32xf32, #tpu.memory_space<vmem>>, vector<2x32xf32>,
    } else {
    }
    %c0 = arith.constant 0 : index
    %c0_1 = arith.constant 0 : index
    %c0_2 = arith.constant 0 : index
    %3 = vector.load %arg2[%c0, %c0_1, %c0_2] : memref<2x8x32xf32, #tpu.memory_space<vmem>>, vector<2x8x32xf32>
    %c0_3 = arith.constant 0 : index
    %c0_4 = arith.constant 0 : index
    %4 = vector.load %arg6[%c0_3, %c0_4] : memref<2x32xf32, #tpu.memory_space<vmem>>, vector<2x32xf32>
    %cst = arith.constant dense<0.000000e+00> : vector<2x32xf32>
    %5 = vector.multi_reduction <add>, %3, %cst [1] : vector<2x8x32xf32> to vector<2x32xf32>
    %6 = arith.addf %4, %5 : vector<2x32xf32>
    %c0_5 = arith.constant 0 : index
    %c0_6 = arith.constant 0 : index
    %7 = vector.load %arg6[%c0_5, %c0_6] : memref<2x32xf32, #tpu.memory_space<vmem>>, vector<2x32xf32>
    tpu.vector_store %arg6[%c0_5, %c0_6], %6 {strides = array<i32>} : memref<2x32xf32, #tpu.memory_space<vmem>>, vector<2x32xf32>,
    %c0_i32_7 = arith.constant 0 : i32
    %8 = arith.cmpi eq, %arg1, %c0_i32_7 : i32
    %9 = arith.extui %8 : i1 to i32
    %c0_i32_8 = arith.constant 0 : i32
    %10 = arith.cmpi ne, %9, %c0_i32_8 : i32
    scf.if %10 {
      %c0_9 = arith.constant 0 : index
      %c0_10 = arith.constant 0 : index
      %11 = vector.load %arg6[%c0_9, %c0_10] : memref<2x32xf32, #tpu.memory_space<vmem>>, vector<2x32xf32>
      %cst_11 = arith.constant 1.250000e-01 : f32
      %12 = vector.broadcast %cst_11 : f32 to vector<2x32xf32>
      %13 = arith.mulf %11, %12 : vector<2x32xf32>
      %c0_12 = arith.constant 0 : index
      %c0_13 = arith.constant 0 : index
      %14 = vector.load %arg3[%c0_12, %c0_13] : memref<32x32xf32, #tpu.memory_space<vmem>>, vector<32x32xf32>
      %cst_14 = arith.constant dense<0.000000e+00> : vector<2x32xf32>
      %15 = tpu.matmul %13, %14, %cst_14 {dimension_numbers = #tpu.dot_dimension_numbers<[1], [0], [0], [1], [0, 0, 1, 1], [], []>} : vector<2x32xf32>, vector<32x32xf32>, vector<2x32xf32> -> vector<2x32xf32>
      %c0_15 = arith.constant 0 : index
      %c0_16 = arith.constant 0 : index
      %16 = vector.load %arg4[%c0_15, %c0_16] : memref<1x32xf32, #tpu.memory_space<vmem>>, vector<1x32xf32>
      %17 = vector.broadcast %16 : vector<1x32xf32> to vector<2x32xf32>
      %18 = arith.addf %15, %17 : vector<2x32xf32>
      %19 = math.tanh %18 : vector<2x32xf32>
      %c0_17 = arith.constant 0 : index
      %c0_18 = arith.constant 0 : index
      %20 = vector.load %arg5[%c0_17, %c0_18] : memref<2x32xf32, #tpu.memory_space<vmem>>, vector<2x32xf32>
      tpu.vector_store %arg5[%c0_17, %c0_18], %19 {strides = array<i32>} : memref<2x32xf32, #tpu.memory_space<vmem>>, vector<2x32xf32>,
    } else {
    }
    return
  }
  func.func @transform_0(%arg0: i32, %arg1: i32) -> (i32, i32, i32) {
    %c0_i32 = arith.constant 0 : i32
    %c0_i32_0 = arith.constant 0 : i32
    return %arg0, %arg1, %c0_i32 : i32, i32, i32
  }
  func.func @transform_1(%arg0: i32, %arg1: i32) -> (i32, i32) {
    %c0_i32 = arith.constant 0 : i32
    %c0_i32_0 = arith.constant 0 : i32
    %c0_i32_1 = arith.constant 0 : i32
    return %c0_i32, %c0_i32_0 : i32, i32
  }
  func.func @transform_2(%arg0: i32, %arg1: i32) -> (i32, i32) {
    %c0_i32 = arith.constant 0 : i32
    %c0_i32_0 = arith.constant 0 : i32
    %c0_i32_1 = arith.constant 0 : i32
    return %c0_i32, %c0_i32_0 : i32, i32
  }
  func.func @transform_3(%arg0: i32, %arg1: i32) -> (i32, i32) {
    %c0_i32 = arith.constant 0 : i32
    %c0_i32_0 = arith.constant 0 : i32
    return %arg0, %c0_i32 : i32, i32
  }
}

</mosaic_0001>

<llo_original>
// kernel: tpu_custom_call.1
$region0: #{tpu_custom_call.1}
  #allocation0 [shape = 'u32[]', space=smem, size = 0x4, offset = 0x4, fixed_abs, tag = 'smem constant byte address 0x4 - core index']
  #allocation1 [shape = 'u32[144,128]{1,0:T(1,128)}', space=vmem, size = 0x12000, scoped, tag = 'internal scratch']
  #allocation2 [shape = 'f32[2,32]{1,0:T(2,128)}', space=vmem, size = 0x400, scoped, tag = 'scratch operand']
  %s0 = inlined_call_operand.hbm [shape: f32[2,8,32], index: 0, kind: input, shape index: {}]
  %s1 = inlined_call_operand.hbm [shape: f32[32,32], index: 1, kind: input, shape index: {}]
  %s2 = inlined_call_operand.vmem [shape: f32[1,32], index: 2, kind: input, shape index: {}]
  %s3 = inlined_call_operand.hbm [shape: f32[2,32], index: 3, kind: output, shape index: {}]
  %s4 = sld [smem:[#allocation0]]
  $region38: #{tpu_custom_call.1} parent=0
    _
  %s6 = ssub.s32 1, %s4
  %s7 = scalar_select 0, %s6, %s4
  $region1: #{tpu_custom_call.1} parent=0
    #allocation3 [shape = 'u8[8192]{0}', space=vmem, size = 0x2000, scoped, tag = 'input window, operand 0, single buffered']
    #allocation4 [shape = 's32[1]{0}', space=sflag, size = 0x4, scoped, tag = 'scoped memory for tpu_custom_call.1']
    #allocation5 [shape = 's32[1]{0}', space=sflag, size = 0x4, scoped, tag = 'scoped memory for tpu_custom_call.1']
    #allocation6 [shape = 'u8[16384]{0}', space=vmem, size = 0x4000, scoped, tag = 'input window, operand 1, single buffered']
    #allocation7 [shape = 's32[1]{0}', space=sflag, size = 0x4, scoped, tag = 'scoped memory for tpu_custom_call.1']
    #allocation8 [shape = 'u8[1024]{0}', space=vmem, size = 0x400, scoped, tag = 'output window, operand 0, single buffered']
    %8 = vsyncpa [#allocation4], 0
    %9 = vsyncpa [#allocation7], 0
    %10 = vsyncpa [#allocation5], 0
    // Predicated region
    $region2: #{tpu_custom_call.1} parent=1 // pred_check
      _
    $region3: #{tpu_custom_call.1} parent=1 // pred_check_branch
      %12 = sbr.rel (0) target = $region5
    $region4: #{tpu_custom_call.1} parent=1 // pred_region
      %s14 = ssub.s32 256, 256
      %15 = vsyncadd [#allocation4], %s14
      %s16 = sshll.u32 [#allocation3], 4
      %s17 = int_to_ptr.vmem [resolvable:$true] %s16
      %22 = dma.hbm_to_vmem [thread:$0]  %s0, 256, %s17, [#allocation4], 128, 128, 8
    $region5: #{tpu_custom_call.1} parent=1 // pred_fallthru
      _
    // Predicated region
    $region6: #{tpu_custom_call.1} parent=1 // pred_check
      _
    $region7: #{tpu_custom_call.1} parent=1 // pred_check_branch
      %24 = sbr.rel (0) target = $region9
    $region8: #{tpu_custom_call.1} parent=1 // pred_region
      %s26 = ssub.s32 512, 512
      %27 = vsyncadd [#allocation7], %s26
      %s28 = sshll.u32 [#allocation6], 4
      %s29 = int_to_ptr.vmem [resolvable:$true] %s28
      %34 = dma.hbm_to_vmem [thread:$0]  %s1, 512, %s29, [#allocation7], 128, 128, 8
    $region9: #{tpu_custom_call.1} parent=1 // pred_fallthru
      _
    // Predicated region
    $region10: #{tpu_custom_call.1} parent=1 // pred_check
      _
    $region11: #{tpu_custom_call.1} parent=1 // pred_check_branch
      %36 = sbr.rel (0) target = $region13
    $region12: #{tpu_custom_call.1} parent=1 // pred_region
      _
    $region13: #{tpu_custom_call.1} parent=1 // pred_fallthru
      _
    // Predicated region
    $region14: #{tpu_custom_call.1} parent=1 // pred_check
      _
    $region15: #{tpu_custom_call.1} parent=1 // pred_check_branch
      %38 = sbr.rel (0) target = $region17
    $region16: #{tpu_custom_call.1} parent=1 // pred_region
      %39 = dma.done [#allocation4], 256
    $region17: #{tpu_custom_call.1} parent=1 // pred_fallthru
      _
    // Predicated region
    $region18: #{tpu_custom_call.1} parent=1 // pred_check
      _
    $region19: #{tpu_custom_call.1} parent=1 // pred_check_branch
      %41 = sbr.rel (0) target = $region21
    $region20: #{tpu_custom_call.1} parent=1 // pred_region
      %42 = dma.done [#allocation7], 512
    $region21: #{tpu_custom_call.1} parent=1 // pred_fallthru
      _
    %p43 = scmp.eq.s32.totalorder 0, 0
    // Predicated region
    $region22: #{tpu_custom_call.1} parent=1 // pred_check
      %p44 = pneg %p43
    $region23: #{tpu_custom_call.1} parent=1 // pred_check_branch
      %46 = sbr.rel (%p44) target = $region25
    $region24: #{tpu_custom_call.1} parent=1 // pred_region
      %vm47 = vcmask 254976
      %48 = vst.msk [vmem:[#allocation2] sm:$0x3] %vm47, 0.0
    $region25: #{tpu_custom_call.1} parent=1 // pred_fallthru
      _
    %v49 = vld [vmem:[#allocation3] sm:$0xff]
    %v50 = vld [vmem:[#allocation3 + $0x8] sm:$0xff]
    %v51 = vld [vmem:[#allocation2] sm:$0x3]
    %vm52 = vcmask 261120
    %v53 = vsel %vm52, %v49, 0.0
    %v54 = vrot.slane %v53, 4
    %v55 = vadd.f32 %v53, %v54
    %v56 = vrot.slane %v55, 2
    %v57 = vadd.f32 %v55, %v56
    %v58 = vrot.slane %v57, 1
    %v59 = vadd.f32 %v57, %v58
    %v60 = vsel %vm52, %v50, 0.0
    %v61 = vrot.slane %v60, 4
    %v62 = vadd.f32 %v60, %v61
    %v63 = vrot.slane %v62, 2
    %v64 = vadd.f32 %v62, %v63
    %v65 = vrot.slane %v64, 1
    %v66 = vadd.f32 %v64, %v65
    %vm69 = vcmask 1041409
    %v70 = vsel %vm69, %v66, %v59
    %v72 = vadd.f32 %v51, %v70
    %vm73 = vcmask 254976
    %74 = vst.msk [vmem:[#allocation2] sm:$0x3] %vm73, %v72
    // Predicated region
    $region26: #{tpu_custom_call.1} parent=1 // pred_check
      %p75 = pneg %p43
    $region27: #{tpu_custom_call.1} parent=1 // pred_check_branch
      %77 = sbr.rel (%p75) target = $region29
    $region28: #{tpu_custom_call.1} parent=1 // pred_region
      %v78 = vld [vmem:[#allocation2] sm:$0x3]
      %v79 = vmul.f32 %v78, 0.125
      %v80 = vld [vmem:[#allocation6] sm:$0xff]
      %v81 = vld [vmem:[#allocation6 + $0x8] sm:$0xff]
      %v82 = vld [vmem:[#allocation6 + $0x10] sm:$0xff]
      %v83 = vld [vmem:[#allocation6 + $0x18] sm:$0xff]
      %v84 = vld [vmem:[%s2] sm:$0x1]
      %v86 = vlaneseq
      %v87 = vshrl.u32 %v86, 7
      %v88 = vsub.s32 0, %v87
      %v89 = vrot.slane %v84, %v88
      %v92 = vsel %vm52, %v79, 0
      %94 = vmatprep.subr.mxu0 0.0
      %95 = vmatpush1.msra.mxu0 %v80
      %96 = vmatprep.subr.mxu0 0.0
      %97 = vmatpush1.msra.mxu0 %v81
      %98 = vmatprep.subr.mxu0 0.0
      %99 = vmatpush1.msra.mxu0 %v82
      %100 = vmatprep.subr.mxu0 0.0
      %101 = vmatpush1.msra.mxu0 %v83
      %102 = vmatprep.subr.mxu0 0.0
      %103 = vmatpush1.msra.mxu0 0.0
      %104 = vmatprep.subr.mxu0 0.0
      %105 = vmatpush1.msra.mxu0 0.0
      %106 = vmatprep.subr.mxu0 0.0
      %107 = vmatpush1.msra.mxu0 0.0
      %108 = vmatprep.subr.mxu0 0.0
      %109 = vmatpush1.msra.mxu0 0.0
      %110 = vmatprep.subr.mxu0 0.0
      %111 = vmatpush1.msra.mxu0 0.0
      %112 = vmatprep.subr.mxu0 0.0
      %113 = vmatpush1.msra.mxu0 0.0
      %114 = vmatprep.subr.mxu0 0.0
      %115 = vmatpush1.msra.mxu0 0.0
      %116 = vmatprep.subr.mxu0 0.0
      %117 = vmatpush1.msra.mxu0 0.0
      %118 = vmatprep.subr.mxu0 0.0
      %119 = vmatpush1.msra.mxu0 0.0
      %120 = vmatprep.subr.mxu0 0.0
      %121 = vmatpush1.msra.mxu0 0.0
      %122 = vmatprep.subr.mxu0 0.0
      %123 = vmatpush1.msra.mxu0 0.0
      %124 = vmatprep.subr.mxu0 0.0
      %125 = vmatpush1.msra.mxu0 0.0
      %126 = vmatprep.subr.mxu0 0.0
      %127 = vmatpush1.msra.mxu0 0.0
      %128 = vmatprep.subr.mxu0 0.0
      %129 = vmatpush1.msra.mxu0 0.0
      %130 = vmatprep.subr.mxu0 0.0
      %131 = vmatpush1.msra.mxu0 0.0
      %132 = vmatprep.subr.mxu0 0.0
      %133 = vmatpush1.msra.mxu0 0.0
      %134 = vmatprep.subr.mxu0 0.0
      %135 = vmatpush1.msra.mxu0 0.0
      %136 = vmatprep.subr.mxu0 0.0
      %137 = vmatpush1.msra.mxu0 0.0
      %138 = vmatprep.subr.mxu0 0.0
      %139 = vmatpush1.msra.mxu0 0.0
      %140 = vmatprep.subr.mxu0 0.0
      %141 = vmatpush1.msra.mxu0 0.0
      %142 = vmatprep.subr.mxu0 0.0
      %143 = vmatpush1.msra.mxu0 0.0
      %144 = vmatprep.subr.mxu0 0.0
      %145 = vmatpush1.msra.mxu0 0.0
      %146 = vmatprep.subr.mxu0 0.0
      %147 = vmatpush1.msra.mxu0 0.0
      %148 = vmatprep.subr.mxu0 0.0
      %149 = vmatpush1.msra.mxu0 0.0
      %150 = vmatprep.subr.mxu0 0.0
      %151 = vmatpush1.msra.mxu0 0.0
      %152 = vmatprep.subr.mxu0 0.0
      %153 = vmatpush1.msra.mxu0 0.0
      %154 = vmatprep.subr.mxu0 0.0
      %155 = vmatpush1.msra.mxu0 0.0
      %156 = vmatprep.subr.mxu0 0.0
      %157 = vmatpush1.msra.mxu0 0.0
      %158 = vmatprep.mubr.f32.mxu0 0.0
      %159 = vmatmul.mubr.f32.gmra.mrb[0].mxu0 %v92
      %v160 = vpop.f32.mrb[0].mxu0
      %v161 = vadd.f32 %v89, %v160
      %v162 = vpop.f32.mrb[0].mxu0
      %163 = vdwg.mxu0
      %v164 = vtanh.pop %v161
      %165 = vst.msk [vmem:[#allocation8] sm:$0x3] %vm73, %v164
    $region29: #{tpu_custom_call.1} parent=1 // pred_fallthru
      _
    // Predicated region
    $region30: #{tpu_custom_call.1} parent=1 // pred_check
      _
    $region31: #{tpu_custom_call.1} parent=1 // pred_check_branch
      %167 = sbr.rel (0) target = $region33
    $region32: #{tpu_custom_call.1} parent=1 // pred_region
      %s169 = ssub.s32 32, 32
      %170 = vsyncadd [#allocation5], %s169
      %s172 = sshll.u32 [#allocation8], 4
      %s173 = int_to_ptr.vmem [resolvable:$true] %s172
      %175 = dma.vmem_to_hbm [thread:$0]  %s173, 32, %s3, [#allocation5]
    $region33: #{tpu_custom_call.1} parent=1 // pred_fallthru
      _
    // Predicated region
    $region34: #{tpu_custom_call.1} parent=1 // pred_check
      _
    $region35: #{tpu_custom_call.1} parent=1 // pred_check_branch
      %177 = sbr.rel (0) target = $region37
    $region36: #{tpu_custom_call.1} parent=1 // pred_region
      %178 = dma.done [#allocation5], 32
    $region37: #{tpu_custom_call.1} parent=1 // pred_fallthru
      _
    %179 = vsyncpa [#allocation4], 1
    %180 = vsyncpa [#allocation7], 1
    %181 = vsyncpa [#allocation5], 1

</llo_original>
